<compile_context>
chip_gen: v7x
topology: tpu7x:2x2x1
jax: 0.10.0
libtpu: 0.0.40
codegen_flags: <defaults>
</compile_context>

<pallas_src>
import math
import functools

import numpy as np
import jax
import jax.numpy as jnp
from jax import lax
from jax.experimental import pallas as pl
from jax.experimental.pallas import tpu as pltpu

BN_EPS = 1e-5
NUM_HEADS = 4           # GraphMultisetTransformer default
GMT_NUM_NODES = 300     # GraphMultisetTransformer default
GMT_POOL_RATIO = 0.25   # GraphMultisetTransformer default
# 32 MiB scoped-VMEM limit: per-graph working sets are small, and 32 MiB leaves compiler
# headroom even on v7x (64 MiB physical VMEM per TensorCore).
VMEM_LIMIT = 32 * 1024 * 1024


# --------------------------------------------------------------------------------------
# Kernel 1 (per GCN layer, grid over graphs):
#   y_b     = A_hat_b @ relu(h_b * scale + shift) @ W + b        (prologue BN folded)
#   stats_b = [ sum_real(y_b), sum_real(y_b^2) ]                 (per-graph partial BN sums)
# --------------------------------------------------------------------------------------

def _gcn_layer_kernel(*refs, din, dout, apply_prologue):
    if apply_prologue:
        a_ref, h_ref, m_ref, ss_ref, w_ref, b_ref, y_ref, st_ref = refs
    else:
        a_ref, h_ref, m_ref, w_ref, b_ref, y_ref, st_ref = refs

    a = a_ref[0]                                   # bf16 [n, n] per-graph normalized adjacency
    h = h_ref[0]                                   # f32  [n, din] pre-BN activations (or x)
    m = m_ref[0]                                   # f32  [n, 1]   node mask

    if apply_prologue:
        # previous layer's BatchNorm (folded scale/shift) + ReLU, deferred into this kernel
        h = jnp.maximum(h * ss_ref[0:1] + ss_ref[1:2], 0.0)

    hb = h.astype(jnp.bfloat16)
    w = w_ref[...]                                 # bf16 [din, dout]
    if din < dout:
        # widening layer: contract the narrow feature dim in the n^2 matmul
        ah = jnp.dot(a, hb, preferred_element_type=jnp.float32)
        y = jnp.dot(ah.astype(jnp.bfloat16), w, preferred_element_type=jnp.float32)
    else:
        hw = jnp.dot(hb, w, preferred_element_type=jnp.float32)
        y = jnp.dot(a, hw.astype(jnp.bfloat16), preferred_element_type=jnp.float32)
    y = y + b_ref[...]

    ym = y * m                                     # padded nodes excluded from BN statistics
    y_ref[0] = y
    st_ref[0] = jnp.concatenate(
        [jnp.sum(ym, axis=0, keepdims=True),
         jnp.sum(ym * y, axis=0, keepdims=True)], axis=0)


def gcn_layer(a_hat, h_in, node_mask, w, b, scale_shift=None):
    B, n, din = (int(s) for s in h_in.shape)
    dout = int(w.shape[1])
    apply_prologue = scale_shift is not None
    w_bf = w.astype(jnp.bfloat16)

    args = [a_hat, h_in, node_mask]
    in_specs = [pl.BlockSpec((1, n, n), lambda bi: (bi, 0, 0)),
                pl.BlockSpec((1, n, din), lambda bi: (bi, 0, 0)),
                pl.BlockSpec((1, n, 1), lambda bi: (bi, 0, 0))]
    if apply_prologue:
        args.append(scale_shift)
        in_specs.append(pl.BlockSpec((2, din), lambda bi: (0, 0)))
    args += [w_bf, b]
    in_specs += [pl.BlockSpec((din, dout), lambda bi: (0, 0)),
                 pl.BlockSpec((1, dout), lambda bi: (0, 0))]

    flops = B * (2 * n * n * min(din, dout) + 2 * n * din * dout)
    bytes_accessed = (B * n * n * 2 + B * n * din * 4 + B * n * 4
                      + din * dout * 2 + dout * 4
                      + B * n * dout * 4 + B * 2 * dout * 4)

    kern = functools.partial(_gcn_layer_kernel, din=din, dout=dout,
                             apply_prologue=apply_prologue)
    y, stats = pl.pallas_call(
        kern,
        grid=(B,),
        out_shape=(jax.ShapeDtypeStruct((B, n, dout), jnp.float32),
                   jax.ShapeDtypeStruct((B, 2, dout), jnp.float32)),
        in_specs=in_specs,
        out_specs=(pl.BlockSpec((1, n, dout), lambda bi: (bi, 0, 0)),
                   pl.BlockSpec((1, 2, dout), lambda bi: (bi, 0, 0))),
        compiler_params=pltpu.CompilerParams(dimension_semantics=("parallel",),
                                             vmem_limit_bytes=VMEM_LIMIT),
        cost_estimate=pl.CostEstimate(flops=int(flops), transcendentals=0,
                                      bytes_accessed=int(bytes_accessed)),
    )(*args)
    return y, stats


def fold_bn(stats, gamma, beta, inv_n):
    """Reduce per-graph partial BN sums in XLA and fold BN into a [2, d] scale/shift."""
    s = jnp.sum(stats, axis=0)                                    # [2, d]
    mean = s[0:1] * inv_n
    # clamp: one-pass E[x^2] - E[x]^2 can go slightly negative from cancellation
    var = jnp.maximum(s[1:2] * inv_n - mean * mean, 0.0)          # biased var (torch training)
    scale = gamma * lax.rsqrt(var + BN_EPS)
    shift = beta - mean * scale
    return jnp.concatenate([scale, shift], axis=0)                # [2, d]


# --------------------------------------------------------------------------------------
# Kernel 2: last-layer BN+ReLU + conv Linear + GraphMultisetTransformer readout + final
# Linear, fused, grid over graphs.
# --------------------------------------------------------------------------------------

def _gmt_readout_kernel(y_ref, a_ref, km_ref, ss_ref, clw_ref, clb_ref,
                        q1_ref, q3_ref, wslab_ref, bslab_ref, pred_ref,
                        *, num_heads, dim, n_labels, offs):
    D, L = dim, n_labels
    dh = D // num_heads
    inv_sqrt_d = 1.0 / math.sqrt(D)   # reference divides by sqrt(dim_V), not per-head dim
    (o_l1, o_kv1, o_o1, o_qkv2, o_o2, o_kv3, o_o3, o_l2, o_ro) = offs

    def W(o, wdt):
        return wslab_ref[:, o:o + wdt]        # bf16 weight slab, static-offset slice

    def Bc(o, wdt):
        return bslab_ref[:, o:o + wdt]        # f32 bias slab, static-offset slice

    # ---- fold last conv layer's BN + ReLU + conv Linear into this kernel's prologue ----
    h = jnp.maximum(y_ref[0] * ss_ref[0:1] + ss_ref[1:2], 0.0)           # [n, dlast]
    h = jnp.dot(h.astype(jnp.bfloat16), clw_ref[...],
                preferred_element_type=jnp.float32) + clb_ref[...]       # [n, D]
    # NOTE: padded rows of h are junk, but they never leak: their A_hat columns are zero
    # and their K/V rows are explicitly zeroed below (== to_dense_batch zero padding).

    a = a_ref[0]                                                         # bf16 [n, n]
    km = km_ref[0]                                                       # f32  [n, 1]

    # per-head column masks, hoisted: built ONCE and reused by all three MAB blocks
    col = lax.broadcasted_iota(jnp.int32, (1, D), 1)
    head_masks = [(col >= hh * dh) & (col < (hh + 1) * dh) for hh in range(num_heads)]

    def mab(q, k, v, wo, bo):
        # Head-masked K/V stacked along the key axis -> ONE scores matmul and ONE softmax
        # for all heads; P @ Vstack re-assembles per-head outputs into disjoint feature
        # columns (identical to split/concat multi-head attention).
        kst = jnp.concatenate([jnp.where(hm, k, 0.0) for hm in head_masks], axis=0)
        vst = jnp.concatenate([jnp.where(hm, v, 0.0) for hm in head_masks], axis=0)
        s = lax.dot_general(q.astype(jnp.bfloat16), kst.astype(jnp.bfloat16),
                            (((1,), (1,)), ((), ())),
                            preferred_element_type=jnp.float32) * inv_sqrt_d   # [S, H*Nk]
        # Deprecated PyG GMT applies softmax over the QUERY/seed axis (dim=1).  The
        # reference's additive key mask is constant along that axis so it cancels; padded
        # keys are handled entirely by the zeroed K/V rows (fragile but intentional).
        s = s - jnp.max(s, axis=0, keepdims=True)
        e = jnp.exp(s)
        # approx reciprocal (EUP slot): tiny relative error vs exact softmax, documented.
        p = e * pl.reciprocal(jnp.sum(e, axis=0, keepdims=True), approx=True)
        attn = jnp.dot(p.astype(jnp.bfloat16), vst.astype(jnp.bfloat16),
                       preferred_element_type=jnp.float32)                      # [S, D]
        out = q + attn
        ff = jnp.dot(out.astype(jnp.bfloat16), wo,
                     preferred_element_type=jnp.float32) + bo
        return out + jnp.maximum(ff, 0.0)

    # GMT lin1 on node features
    xg = jnp.dot(h.astype(jnp.bfloat16), W(o_l1, D),
                 preferred_element_type=jnp.float32) + Bc(o_l1, D)               # [n, D]

    # pool 1: GMPool_G (PMA; K/V are GCNConv on the graph, fused K|V projection)
    kvp = jnp.dot(xg.astype(jnp.bfloat16), W(o_kv1, 2 * D),
                  preferred_element_type=jnp.float32)                            # [n, 2D]
    kv = jnp.dot(a, kvp.astype(jnp.bfloat16),
                 preferred_element_type=jnp.float32) + Bc(o_kv1, 2 * D)
    kv = kv * km                                                                 # zero padded rows
    out1 = mab(q1_ref[...], kv[:, :D], kv[:, D:], W(o_o1, D), Bc(o_o1, D))       # [ks, D]

    # pool 2: SelfAtt (SAB), fused Q|K|V projection, no mask
    qkv = jnp.dot(out1.astype(jnp.bfloat16), W(o_qkv2, 3 * D),
                  preferred_element_type=jnp.float32) + Bc(o_qkv2, 3 * D)
    out2 = mab(qkv[:, :D], qkv[:, D:2 * D], qkv[:, 2 * D:],
               W(o_o2, D), Bc(o_o2, D))                                          # [ks, D]

    # pool 3: GMPool_I (PMA with a single seed), fused K|V projection, no mask
    kv3 = jnp.dot(out2.astype(jnp.bfloat16), W(o_kv3, 2 * D),
                  preferred_element_type=jnp.float32) + Bc(o_kv3, 2 * D)
    out3 = mab(q3_ref[...], kv3[:, :D], kv3[:, D:], W(o_o3, D), Bc(o_o3, D))     # [1, D]

    # GMT lin2 + final readout Linear(pDim, pNumLabels)
    yv = jnp.dot(out3.astype(jnp.bfloat16), W(o_l2, D),
                 preferred_element_type=jnp.float32) + Bc(o_l2, D)
    pred_ref[0] = jnp.dot(yv.astype(jnp.bfloat16), W(o_ro, L),
                          preferred_element_type=jnp.float32) + Bc(o_ro, L)


def _pack_gmt_slabs(gmt, readout_lin, D, L):
    """Pack the small GMT weights/biases into one bf16 weight slab and one f32 bias slab."""
    ws = [gmt["lin1"]["w"], gmt["pma1"]["wkv"], gmt["pma1"]["wo"],
          gmt["sab"]["wqkv"], gmt["sab"]["wo"],
          gmt["pma2"]["wkv"], gmt["pma2"]["wo"],
          gmt["lin2"]["w"], readout_lin["w"]]
    bs = [gmt["lin1"]["b"], gmt["pma1"]["bkv"], gmt["pma1"]["bo"],
          gmt["sab"]["bqkv"], gmt["sab"]["bo"],
          gmt["pma2"]["bkv"], gmt["pma2"]["bo"],
          gmt["lin2"]["b"], readout_lin["b"]]
    widths = [D, 2 * D, D, 3 * D, D, 2 * D, D, D, L]
    offs, o = [], 0
    for wdt in widths:
        offs.append(o)
        o += wdt
    wslab = jnp.concatenate(ws, axis=1).astype(jnp.bfloat16)    # [D, 12D+L]
    bslab = jnp.concatenate(bs, axis=1)                          # [1, 12D+L]
    return wslab, bslab, tuple(offs)


def gmt_readout(y_last, a_hat, node_mask, scale_shift_last, conv_lin, gmt, readout_lin,
                num_heads=NUM_HEADS):
    B, n, dlast = (int(s) for s in y_last.shape)
    D = int(conv_lin["w"].shape[1])
    L = int(readout_lin["w"].shape[1])
    ks = int(gmt["pma1"]["seeds"].shape[1])

    # Seed-query projections are shared across graphs: compute once, outside the grid.
    q1 = jnp.dot(gmt["pma1"]["seeds"][0], gmt["pma1"]["wq"]) + gmt["pma1"]["bq"]   # [ks, D]
    q3 = jnp.dot(gmt["pma2"]["seeds"][0], gmt["pma2"]["wq"]) + gmt["pma2"]["bq"]   # [1, D]

    wslab, bslab, offs = _pack_gmt_slabs(gmt, readout_lin, D, L)
    clw = conv_lin["w"].astype(jnp.bfloat16)
    clb = conv_lin["b"]

    args = [y_last, a_hat, node_mask, scale_shift_last, clw, clb, q1, q3, wslab, bslab]

    def shared(x):
        nd = x.ndim
        return pl.BlockSpec(x.shape, lambda b, _nd=nd: (0,) * _nd)

    in_specs = ([pl.BlockSpec((1, n, dlast), lambda b: (b, 0, 0)),
                 pl.BlockSpec((1, n, n), lambda b: (b, 0, 0)),
                 pl.BlockSpec((1, n, 1), lambda b: (b, 0, 0))]
                + [shared(x) for x in args[3:]])

    # advisory cost estimate for the XLA scheduler (per-graph FLOPs x B)
    H = num_heads
    fl = (2 * n * dlast * D + 2 * n * D * D                     # conv_lin fold + lin1
          + 2 * n * D * 2 * D + 2 * n * n * 2 * D               # kv1 projection + A @ kvp
          + 4 * ks * (H * n) * D + 2 * ks * D * D               # mab1 scores+attn+ff
          + 2 * ks * D * 3 * D                                  # qkv2 projection
          + 4 * ks * (H * ks) * D + 2 * ks * D * D              # mab2
          + 2 * ks * D * 2 * D                                  # kv3 projection
          + 4 * (H * ks) * D + 2 * D * D                        # mab3
          + 2 * D * D + 2 * D * L)                              # lin2 + readout
    trans = ks * H * n + ks * H * ks + H * ks
    bytes_accessed = sum(int(np.prod(t.shape)) * t.dtype.itemsize for t in args) + B * L * 4

    kern = functools.partial(_gmt_readout_kernel, num_heads=num_heads, dim=D,
                             n_labels=L, offs=offs)
    pred = pl.pallas_call(
        kern,
        grid=(B,),
        out_shape=jax.ShapeDtypeStruct((B, 1, L), jnp.float32),
        in_specs=in_specs,
        out_specs=pl.BlockSpec((1, 1, L), lambda b: (b, 0, 0)),
        compiler_params=pltpu.CompilerParams(dimension_semantics=("parallel",),
                                             vmem_limit_bytes=VMEM_LIMIT),
        cost_estimate=pl.CostEstimate(flops=int(B * fl), transcendentals=int(B * trans),
                                      bytes_accessed=int(bytes_accessed)),
    )(*args)
    return pred.reshape(B, L)


# --------------------------------------------------------------------------------------
# Host-side glue: per-graph normalized adjacency, static dense batching, parameter init
# --------------------------------------------------------------------------------------

def make_densifier(sizes, n_max):
    """to_dense_batch via static per-graph slices (graphs contiguous) -- no scatter."""
    offs = [0]
    for s in sizes[:-1]:
        offs.append(offs[-1] + s)

    def densify(x_flat):
        d = x_flat.shape[-1]
        rows = []
        for off, s in zip(offs, sizes):
            xi = x_flat[off:off + s]
            if s < n_max:
                xi = jnp.concatenate([xi, jnp.zeros((n_max - s, d), x_flat.dtype)], axis=0)
            rows.append(xi)
        return jnp.stack(rows, axis=0)

    return densify


def prepare_graph(edge_index_np, batch_np, num_graphs):
    """Per-graph A_hat = D^-1/2 (A + I) D^-1/2 (bf16), node mask, densifier."""
    sizes = np.bincount(batch_np, minlength=num_graphs).astype(np.int64)
    n_max = int(sizes.max())
    n_max = ((n_max + 7) // 8) * 8                 # sublane-friendly padding
    offsets = np.zeros(num_graphs, np.int64)
    offsets[1:] = np.cumsum(sizes)[:-1]

    A = np.zeros((num_graphs, n_max, n_max), np.float32)
    src, dst = edge_index_np[0], edge_index_np[1]
    gb = batch_np[src]
    np.add.at(A, (gb, dst - offsets[gb], src - offsets[gb]), 1.0)  # row=target, col=source
    for b in range(num_graphs):
        s = int(sizes[b])
        A[b, :s, :s] += np.eye(s, dtype=np.float32)
        deg = A[b, :s, :s].sum(axis=1)
        dinv = 1.0 / np.sqrt(np.maximum(deg, 1e-12))
        A[b, :s, :s] = (dinv[:, None] * A[b, :s, :s]) * dinv[None, :]

    mask = np.zeros((num_graphs, n_max, 1), np.float32)
    for b in range(num_graphs):
        mask[b, :int(sizes[b]), 0] = 1.0

    a_hat = jnp.asarray(A, dtype=jnp.bfloat16)
    node_mask = jnp.asarray(mask)
    densify = make_densifier([int(s) for s in sizes], n_max)
    return a_hat, node_mask, densify, int(sizes.sum())


def _glorot(key, din, dout):
    lim = math.sqrt(6.0 / (din + dout))
    return jax.random.uniform(key, (din, dout), jnp.float32, -lim, lim)


def _seed_init(key, num_seeds, dim):
    lim = math.sqrt(6.0 / (num_seeds + dim))
    return jax.random.uniform(key, (1, num_seeds, dim), jnp.float32, -lim, lim)


def _linear_p(key, din, dout):
    return dict(w=_glorot(key, din, dout), b=jnp.zeros((1, dout), jnp.float32))


def _pma_p(key, d, num_seeds):
    k0, k1, k2, k3, k4 = jax.random.split(key, 5)
    return dict(seeds=_seed_init(k0, num_seeds, d),
                wq=_glorot(k1, d, d), bq=jnp.zeros((1, d), jnp.float32),
                wkv=jnp.concatenate([_glorot(k2, d, d), _glorot(k3, d, d)], axis=1),
                bkv=jnp.zeros((1, 2 * d), jnp.float32),
                wo=_glorot(k4, d, d), bo=jnp.zeros((1, d), jnp.float32))


def _sab_p(key, d):
    k1, k2, k3, k4 = jax.random.split(key, 4)
    return dict(wqkv=jnp.concatenate([_glorot(k1, d, d), _glorot(k2, d, d),
                                      _glorot(k3, d, d)], axis=1),
                bqkv=jnp.zeros((1, 3 * d), jnp.float32),
                wo=_glorot(k4, d, d), bo=jnp.zeros((1, d), jnp.float32))


def init_params(key, p_num_layers, p_dim, p_hdim, p_num_labels):
    keys = iter(jax.random.split(key, 64))
    nk = lambda: next(keys)

    conv_layers = []
    cur_d, cur_h = p_dim, p_hdim
    for i in range(p_num_layers):
        conv_layers.append(dict(
            w=_glorot(nk(), cur_d, cur_h),
            b=jnp.zeros((1, cur_h), jnp.float32),
            gamma=jnp.ones((1, cur_h), jnp.float32),
            beta=jnp.zeros((1, cur_h), jnp.float32)))
        cur_d = cur_h
        if i < 2:
            cur_h *= 2
    conv_lin = _linear_p(nk(), cur_h, p_dim)

    k_seeds = math.ceil(GMT_NUM_NODES * GMT_POOL_RATIO)   # 75
    gmt = dict(
        lin1=_linear_p(nk(), p_dim, p_dim),
        pma1=_pma_p(nk(), p_dim, k_seeds),
        sab=_sab_p(nk(), p_dim),
        pma2=_pma_p(nk(), p_dim, 1),                      # GMPool_I: 1 seed (last pool)
        lin2=_linear_p(nk(), p_dim, p_dim),
        k_seeds=k_seeds)
    readout_lin = _linear_p(nk(), p_dim, p_num_labels)
    return dict(conv_layers=conv_layers, conv_lin=conv_lin, gmt=gmt,
                readout_lin=readout_lin)


# --------------------------------------------------------------------------------------
# Full forward
# --------------------------------------------------------------------------------------

def gcn_enc_forward(params, x, a_hat, node_mask, densify, n_real, edge_weight=None):
    # `edge_weight` is accepted but unused, exactly as in the reference module
    # (torch_geometric Sequential only forwards `x, edge_index` to GCNConv).
    del edge_weight
    inv_n = 1.0 / float(n_real)

    h = densify(x)                                             # [B, n_max, pDim]
    ss = None
    for layer in params["conv_layers"]:
        # each layer: gridded pallas_call -> pre-BN activations + per-graph BN partials;
        # previous layer's BN+ReLU is folded into this call's prologue (deferred BN).
        h, stats = gcn_layer(a_hat, h, node_mask, layer["w"], layer["b"], ss)
        ss = fold_bn(stats, layer["gamma"], layer["beta"], inv_n)

    # last layer's BN+ReLU and the conv Linear are folded into the GMT readout kernel.
    return gmt_readout(h, a_hat, node_mask, ss, params["conv_lin"],
                       params["gmt"], params["readout_lin"])


# --------------------------------------------------------------------------------------
# Demo
# --------------------------------------------------------------------------------------

if __name__ == "__main__":
    p_dim, p_hdim, p_num_layers, p_num_labels = 16, 16, 3, 8

    # two graphs: 14 + 10 nodes, ring topology (both edge directions), contiguous per graph
    sizes = [14, 10]
    num_graphs = len(sizes)
    total_nodes = sum(sizes)
    batch_np = np.concatenate([np.full(s, i, np.int64) for i, s in enumerate(sizes)])
    edges = []
    offset = 0
    for s in sizes:
        for i in range(s):
            j = (i + 1) % s
            edges.append((offset + i, offset + j))
            edges.append((offset + j, offset + i))
        offset += s
    edge_index_np = np.asarray(edges, np.int64).T                     # [2, E]

    a_hat, node_mask, densify, n_real = prepare_graph(edge_index_np, batch_np, num_graphs)

    key = jax.random.PRNGKey(0)
    kx, kp = jax.random.split(key)
    x = jax.random.normal(kx, (total_nodes, p_dim), jnp.float32)
    edge_weight = jnp.ones((edge_index_np.shape[1],), jnp.float32)    # unused by the forward
    params = init_params(kp, p_num_layers, p_dim, p_hdim, p_num_labels)

    pred = gcn_enc_forward(params, x, a_hat, node_mask, densify, n_real, edge_weight)
    pred = jax.block_until_ready(pred)
    assert pred.shape == (num_graphs, p_num_labels)
    assert bool(jnp.all(jnp.isfinite(pred)))
    print("KERNEL_OK")
</pallas_src>

<mosaic_0001>
module attributes {stable_mosaic.version = 11 : i64} {
  func.func @_gcn_layer_kernel(%arg0: i32, %arg1: memref<1x16x16xbf16, #tpu.memory_space<vmem>>, %arg2: memref<1x16x16xf32, #tpu.memory_space<vmem>>, %arg3: memref<1x16x1xf32, #tpu.memory_space<vmem>>, %arg4: memref<16x16xbf16, #tpu.memory_space<vmem>>, %arg5: memref<1x16xf32, #tpu.memory_space<vmem>>, %arg6: memref<1x16x16xf32, #tpu.memory_space<vmem>>, %arg7: memref<1x2x16xf32, #tpu.memory_space<vmem>>) attributes {dimension_semantics = [#tpu.dimension_semantics<parallel>], iteration_bounds = array<i64: 2>, scalar_prefetch = 0 : i64, scratch_operands = 0 : i64, tpu.core_type = #tpu.core_type<tc>, window_params = [{transform_indices = @transform_0, window_bounds = array<i64: 1, 16, 16>}, {transform_indices = @transform_1, window_bounds = array<i64: 1, 16, 16>}, {transform_indices = @transform_2, window_bounds = array<i64: 1, 16, 1>}, {pipeline_mode = #tpu.pipeline_mode<synchronous>, transform_indices = @transform_3, window_bounds = array<i64: 16, 16>}, {pipeline_mode = #tpu.pipeline_mode<synchronous>, transform_indices = @transform_4, window_bounds = array<i64: 1, 16>}, {transform_indices = @transform_5, window_bounds = array<i64: 1, 16, 16>}, {transform_indices = @transform_6, window_bounds = array<i64: 1, 2, 16>}]} {
    %c0 = arith.constant 0 : index
    %c0_0 = arith.constant 0 : index
    %c0_1 = arith.constant 0 : index
    %0 = vector.load %arg1[%c0, %c0_0, %c0_1] : memref<1x16x16xbf16, #tpu.memory_space<vmem>>, vector<1x16x16xbf16>
    %1 = vector.shape_cast %0 : vector<1x16x16xbf16> to vector<16x16xbf16>
    %c0_2 = arith.constant 0 : index
    %c0_3 = arith.constant 0 : index
    %c0_4 = arith.constant 0 : index
    %2 = vector.load %arg2[%c0_2, %c0_3, %c0_4] : memref<1x16x16xf32, #tpu.memory_space<vmem>>, vector<1x16x16xf32>
    %3 = vector.shape_cast %2 : vector<1x16x16xf32> to vector<16x16xf32>
    %c0_5 = arith.constant 0 : index
    %c0_6 = arith.constant 0 : index
    %c0_7 = arith.constant 0 : index
    %4 = vector.load %arg3[%c0_5, %c0_6, %c0_7] : memref<1x16x1xf32, #tpu.memory_space<vmem>>, vector<1x16x1xf32>
    %5 = vector.shape_cast %4 : vector<1x16x1xf32> to vector<16x1xf32>
    %6 = arith.truncf %3 : vector<16x16xf32> to vector<16x16xbf16>
    %c0_8 = arith.constant 0 : index
    %c0_9 = arith.constant 0 : index
    %7 = vector.load %arg4[%c0_8, %c0_9] : memref<16x16xbf16, #tpu.memory_space<vmem>>, vector<16x16xbf16>
    %cst = arith.constant dense<0.000000e+00> : vector<16x16xf32>
    %8 = tpu.matmul %6, %7, %cst {dimension_numbers = #tpu.dot_dimension_numbers<[1], [0], [0], [1], [0, 0, 1, 1], [], []>} : vector<16x16xbf16>, vector<16x16xbf16>, vector<16x16xf32> -> vector<16x16xf32>
    %9 = arith.truncf %8 : vector<16x16xf32> to vector<16x16xbf16>
    %cst_10 = arith.constant dense<0.000000e+00> : vector<16x16xf32>
    %10 = tpu.matmul %1, %9, %cst_10 {dimension_numbers = #tpu.dot_dimension_numbers<[1], [0], [0], [1], [0, 0, 1, 1], [], []>} : vector<16x16xbf16>, vector<16x16xbf16>, vector<16x16xf32> -> vector<16x16xf32>
    %c0_11 = arith.constant 0 : index
    %c0_12 = arith.constant 0 : index
    %11 = vector.load %arg5[%c0_11, %c0_12] : memref<1x16xf32, #tpu.memory_space<vmem>>, vector<1x16xf32>
    %12 = vector.broadcast %11 : vector<1x16xf32> to vector<16x16xf32>
    %13 = arith.addf %10, %12 : vector<16x16xf32>
    %14 = vector.broadcast %5 : vector<16x1xf32> to vector<16x16xf32>
    %15 = arith.mulf %13, %14 : vector<16x16xf32>
    %c0_13 = arith.constant 0 : index
    %c0_14 = arith.constant 0 : index
    %c0_15 = arith.constant 0 : index
    %16 = vector.load %arg6[%c0_13, %c0_14, %c0_15] : memref<1x16x16xf32, #tpu.memory_space<vmem>>, vector<1x16x16xf32>
    %17 = vector.shape_cast %16 : vector<1x16x16xf32> to vector<16x16xf32>
    %18 = vector.shape_cast %13 : vector<16x16xf32> to vector<1x16x16xf32>
    tpu.vector_store %arg6[%c0_13, %c0_14, %c0_15], %18 {strides = array<i32>} : memref<1x16x16xf32, #tpu.memory_space<vmem>>, vector<1x16x16xf32>,
    %cst_16 = arith.constant dense<0.000000e+00> : vector<16xf32>
    %19 = vector.multi_reduction <add>, %15, %cst_16 [0] : vector<16x16xf32> to vector<16xf32>
    %20 = vector.shape_cast %19 : vector<16xf32> to vector<1x16xf32>
    %21 = arith.mulf %15, %13 : vector<16x16xf32>
    %cst_17 = arith.constant dense<0.000000e+00> : vector<16xf32>
    %22 = vector.multi_reduction <add>, %21, %cst_17 [0] : vector<16x16xf32> to vector<16xf32>
    %23 = vector.shape_cast %22 : vector<16xf32> to vector<1x16xf32>
    %24 = tpu.concatenate %20, %23 in 0 : vector<1x16xf32>, vector<1x16xf32> -> vector<2x16xf32>
    %c0_18 = arith.constant 0 : index
    %c0_19 = arith.constant 0 : index
    %c0_20 = arith.constant 0 : index
    %25 = vector.load %arg7[%c0_18, %c0_19, %c0_20] : memref<1x2x16xf32, #tpu.memory_space<vmem>>, vector<1x2x16xf32>
    %26 = vector.shape_cast %25 : vector<1x2x16xf32> to vector<2x16xf32>
    %27 = vector.shape_cast %24 : vector<2x16xf32> to vector<1x2x16xf32>
    tpu.vector_store %arg7[%c0_18, %c0_19, %c0_20], %27 {strides = array<i32>} : memref<1x2x16xf32, #tpu.memory_space<vmem>>, vector<1x2x16xf32>,
    return
  }
  func.func @transform_0(%arg0: i32) -> (i32, i32, i32) {
    %c0_i32 = arith.constant 0 : i32
    %c0_i32_0 = arith.constant 0 : i32
    %c0_i32_1 = arith.constant 0 : i32
    return %arg0, %c0_i32, %c0_i32_0 : i32, i32, i32
  }
  func.func @transform_1(%arg0: i32) -> (i32, i32, i32) {
    %c0_i32 = arith.constant 0 : i32
    %c0_i32_0 = arith.constant 0 : i32
    %c0_i32_1 = arith.constant 0 : i32
    return %arg0, %c0_i32, %c0_i32_0 : i32, i32, i32
  }
  func.func @transform_2(%arg0: i32) -> (i32, i32, i32) {
    %c0_i32 = arith.constant 0 : i32
    %c0_i32_0 = arith.constant 0 : i32
    %c0_i32_1 = arith.constant 0 : i32
    return %arg0, %c0_i32, %c0_i32_0 : i32, i32, i32
  }
  func.func @transform_3(%arg0: i32) -> (i32, i32) {
    %c0_i32 = arith.constant 0 : i32
    %c0_i32_0 = arith.constant 0 : i32
    %c0_i32_1 = arith.constant 0 : i32
    return %c0_i32, %c0_i32_0 : i32, i32
  }
  func.func @transform_4(%arg0: i32) -> (i32, i32) {
    %c0_i32 = arith.constant 0 : i32
    %c0_i32_0 = arith.constant 0 : i32
    %c0_i32_1 = arith.constant 0 : i32
    return %c0_i32, %c0_i32_0 : i32, i32
  }
  func.func @transform_5(%arg0: i32) -> (i32, i32, i32) {
    %c0_i32 = arith.constant 0 : i32
    %c0_i32_0 = arith.constant 0 : i32
    %c0_i32_1 = arith.constant 0 : i32
    return %arg0, %c0_i32, %c0_i32_0 : i32, i32, i32
  }
  func.func @transform_6(%arg0: i32) -> (i32, i32, i32) {
    %c0_i32 = arith.constant 0 : i32
    %c0_i32_0 = arith.constant 0 : i32
    %c0_i32_1 = arith.constant 0 : i32
    return %arg0, %c0_i32, %c0_i32_0 : i32, i32, i32
  }
}

</mosaic_0001>

<llo_original>
// kernel: tpu_custom_call.1
$region0: #{tpu_custom_call.1}
  #allocation0 [shape = 'u32[]', space=smem, size = 0x4, offset = 0x4, fixed_abs, tag = 'smem constant byte address 0x4 - core index']
  #allocation1 [shape = 'u32[144,128]{1,0:T(1,128)}', space=vmem, size = 0x12000, scoped, tag = 'internal scratch']
  %s0 = inlined_call_operand.hbm [shape: bf16[2,16,16], index: 0, kind: input, shape index: {}]
  %s1 = inlined_call_operand.vmem [shape: f32[2,16,16], index: 1, kind: input, shape index: {}]
  %s2 = inlined_call_operand.vmem [shape: f32[2,16,1], index: 2, kind: input, shape index: {}]
  %s3 = inlined_call_operand.vmem [shape: bf16[16,16], index: 3, kind: input, shape index: {}]
  %s4 = inlined_call_operand.vmem [shape: f32[1,16], index: 4, kind: input, shape index: {}]
  %s5 = inlined_call_operand.hbm [shape: f32[2,16,16], index: 5, kind: output, shape index: {0}]
  %s6 = inlined_call_operand.hbm [shape: f32[2,2,16], index: 6, kind: output, shape index: {1}]
  %7 = xla_tuple %s5, %s6
  %s8 = sld [smem:[#allocation0]]
  $region65: #{tpu_custom_call.1} parent=0
    _
  %s10 = ssub.s32 1, %s8
  %s11 = scalar_select 0, %s10, %s8
  $region1: #{tpu_custom_call.1} parent=0
    #allocation2 [shape = 'u8[8192]{0}', space=vmem, size = 0x2000, scoped, tag = 'input window, operand 0']
    #allocation3 [shape = 's32[2]{0}', space=sflag, size = 0x8, scoped, tag = 'scoped memory for tpu_custom_call.1']
    #allocation4 [shape = 's32[2]{0}', space=sflag, size = 0x8, scoped, tag = 'scoped memory for tpu_custom_call.1']
    #allocation5 [shape = 'u8[16384]{0}', space=vmem, size = 0x4000, scoped, tag = 'output window, operand 0']
    #allocation6 [shape = 'u8[2048]{0}', space=vmem, size = 0x800, scoped, tag = 'output window, operand 1']
    #allocation7 [shape = 's32[2]{0}', space=sflag, size = 0x8, scoped, tag = 'scoped memory for tpu_custom_call.1']
    %12 = vsyncpa [#allocation3], 0
    %s13 = scalar_lea.sflag [#allocation3], 1
    %14 = vsyncpa %s13, 0
    %15 = vsyncpa [#allocation4], 0
    %s16 = scalar_lea.sflag [#allocation4], 1
    %17 = vsyncpa %s16, 0
    %18 = vsyncpa [#allocation7], 0
    %s19 = scalar_lea.sflag [#allocation7], 1
    %20 = vsyncpa %s19, 0
    loop: start=0, step=1, limit=4
    $region2: #{tpu_custom_call.1} parent=1 // loop_pre_header
      _
    $region3: #{tpu_custom_call.1} parent=1 // loop_header
      %s22 = sphi 0, %s26
      %p23 = scmp.ge.s32.totalorder %s22, 4
      %s32 = sphi 0, %s34
      %s35 = sphi 0, %s32
      %s36 = sphi 0, %s35
      %s52 = sphi 0, %s36
      %s58 = sphi 0, %s60
      %s61 = sphi 0, %s58
      %s62 = sphi 0, %s61
      %s78 = sphi 0, %s62
      %s84 = sphi 0, %s86
      %s87 = sphi 0, %s84
      %s88 = sphi 0, %s87
      %s104 = sphi 0, %s88
      %s108 = sphi 0, %s108
      %s110 = sphi 0, %s108
      %s111 = sphi 0, %s110
      %s125 = sphi 0, %s111
      %s129 = sphi 0, %s129
      %s131 = sphi 0, %s129
      %s132 = sphi 0, %s131
      %s146 = sphi 0, %s132
      %s152 = sphi 0, %s154
      %s155 = sphi 0, %s152
      %s156 = sphi 0, %s155
      %s172 = sphi 0, %s156
      %s178 = sphi 0, %s180
      %s181 = sphi 0, %s178
      %s182 = sphi 0, %s181
      %s198 = sphi 0, %s182
    $region4: #{tpu_custom_call.1} parent=1 // loop_header_branch
      %25 = sbr.rel (%p23) target = $region8
    $region5: #{tpu_custom_call.1} parent=1 // loop_body
      %s27 = ssub.s32 %s22, 1
      %s28 = ssub.s32 %s22, 2
      %s29 = sadd.s32 %s22, 1
      %s30 = ssub.s32 %s22, %s29
      %p31 = scmp.eq.s32.totalorder %s30, 0
      %s33 = sadd.s32 %s32, 1
      %s34 = scalar_select %p31, %s32, %s33
      %p37 = pneg %p31
      %p38 = scmp.eq.s32.totalorder %s22, 1
      %p39 = por %p37, %p38
      %p40 = scmp.ne.s32.totalorder %s32, %s35
      %p41 = scmp.eq.s32.totalorder %s22, 0
      %p42 = por %p40, %p41
      %p43 = scmp.ne.s32.totalorder %s32, %s35
      %p44 = scmp.eq.s32.totalorder %s27, 1
      %p45 = por %p43, %p44
      %p46 = scmp.ne.s32.totalorder %s35, %s36
      %p47 = scmp.eq.s32.totalorder %s27, 0
      %p48 = por %p46, %p47
      %p49 = scmp.ne.s32.totalorder %s35, %s36
      %p50 = scmp.eq.s32.totalorder %s28, 1
      %p51 = por %p49, %p50
      %p53 = scmp.ne.s32.totalorder %s36, %s52
      %p54 = scmp.eq.s32.totalorder %s28, 0
      %p55 = por %p53, %p54
      %s56 = ssub.s32 %s22, %s29
      %p57 = scmp.eq.s32.totalorder %s56, 0
      %s59 = sadd.s32 %s58, 1
      %s60 = scalar_select %p57, %s58, %s59
      %p63 = pneg %p57
      %p64 = scmp.eq.s32.totalorder %s22, 1
      %p65 = por %p63, %p64
      %p66 = scmp.ne.s32.totalorder %s58, %s61
      %p67 = scmp.eq.s32.totalorder %s22, 0
      %p68 = por %p66, %p67
      %p69 = scmp.ne.s32.totalorder %s58, %s61
      %p70 = scmp.eq.s32.totalorder %s27, 1
      %p71 = por %p69, %p70
      %p72 = scmp.ne.s32.totalorder %s61, %s62
      %p73 = scmp.eq.s32.totalorder %s27, 0
      %p74 = por %p72, %p73
      %p75 = scmp.ne.s32.totalorder %s61, %s62
      %p76 = scmp.eq.s32.totalorder %s28, 1
      %p77 = por %p75, %p76
      %p79 = scmp.ne.s32.totalorder %s62, %s78
      %p80 = scmp.eq.s32.totalorder %s28, 0
      %p81 = por %p79, %p80
      %s82 = ssub.s32 %s22, %s29
      %p83 = scmp.eq.s32.totalorder %s82, 0
      %s85 = sadd.s32 %s84, 1
      %s86 = scalar_select %p83, %s84, %s85
      %p89 = pneg %p83
      %p90 = scmp.eq.s32.totalorder %s22, 1
      %p91 = por %p89, %p90
      %p92 = scmp.ne.s32.totalorder %s84, %s87
      %p93 = scmp.eq.s32.totalorder %s22, 0
      %p94 = por %p92, %p93
      %p95 = scmp.ne.s32.totalorder %s84, %s87
      %p96 = scmp.eq.s32.totalorder %s27, 1
      %p97 = por %p95, %p96
      %p98 = scmp.ne.s32.totalorder %s87, %s88
      %p99 = scmp.eq.s32.totalorder %s27, 0
      %p100 = por %p98, %p99
      %p101 = scmp.ne.s32.totalorder %s87, %s88
      %p102 = scmp.eq.s32.totalorder %s28, 1
      %p103 = por %p101, %p102
      %p105 = scmp.ne.s32.totalorder %s88, %s104
      %p106 = scmp.eq.s32.totalorder %s28, 0
      %p107 = por %p105, %p106
      %s109 = sadd.s32 %s108, 1
      %p112 = scmp.eq.s32.totalorder %s22, 1
      %p113 = scmp.ne.s32.totalorder %s108, %s110
      %p114 = scmp.eq.s32.totalorder %s22, 0
      %p115 = por %p113, %p114
      %p116 = scmp.ne.s32.totalorder %s108, %s110
      %p117 = scmp.eq.s32.totalorder %s27, 1
      %p118 = por %p116, %p117
      %p119 = scmp.ne.s32.totalorder %s110, %s111
      %p120 = scmp.eq.s32.totalorder %s27, 0
      %p121 = por %p119, %p120
      %p122 = scmp.ne.s32.totalorder %s110, %s111
      %p123 = scmp.eq.s32.totalorder %s28, 1
      %p124 = por %p122, %p123
      %p126 = scmp.ne.s32.totalorder %s111, %s125
      %p127 = scmp.eq.s32.totalorder %s28, 0
      %p128 = por %p126, %p127
      %s130 = sadd.s32 %s129, 1
      %p133 = scmp.eq.s32.totalorder %s22, 1
      %p134 = scmp.ne.s32.totalorder %s129, %s131
      %p135 = scmp.eq.s32.totalorder %s22, 0
      %p136 = por %p134, %p135
      %p137 = scmp.ne.s32.totalorder %s129, %s131
      %p138 = scmp.eq.s32.totalorder %s27, 1
      %p139 = por %p137, %p138
      %p140 = scmp.ne.s32.totalorder %s131, %s132
      %p141 = scmp.eq.s32.totalorder %s27, 0
      %p142 = por %p140, %p141
      %p143 = scmp.ne.s32.totalorder %s131, %s132
      %p144 = scmp.eq.s32.totalorder %s28, 1
      %p145 = por %p143, %p144
      %p147 = scmp.ne.s32.totalorder %s132, %s146
      %p148 = scmp.eq.s32.totalorder %s28, 0
      %p149 = por %p147, %p148
      %s150 = ssub.s32 %s22, %s29
      %p151 = scmp.eq.s32.totalorder %s150, 0
      %s153 = sadd.s32 %s152, 1
      %s154 = scalar_select %p151, %s152, %s153
      %p157 = pneg %p151
      %p158 = scmp.eq.s32.totalorder %s22, 1
      %p159 = por %p157, %p158
      %p160 = scmp.ne.s32.totalorder %s152, %s155
      %p161 = scmp.eq.s32.totalorder %s22, 0
      %p162 = por %p160, %p161
      %p163 = scmp.ne.s32.totalorder %s152, %s155
      %p164 = scmp.eq.s32.totalorder %s27, 1
      %p165 = por %p163, %p164
      %p166 = scmp.ne.s32.totalorder %s155, %s156
      %p167 = scmp.eq.s32.totalorder %s27, 0
      %p168 = por %p166, %p167
      %p169 = scmp.ne.s32.totalorder %s155, %s156
      %p170 = scmp.eq.s32.totalorder %s28, 1
      %p171 = por %p169, %p170
      %p173 = scmp.ne.s32.totalorder %s156, %s172
      %p174 = scmp.eq.s32.totalorder %s28, 0
      %p175 = por %p173, %p174
      %s176 = ssub.s32 %s22, %s29
      %p177 = scmp.eq.s32.totalorder %s176, 0
      %s179 = sadd.s32 %s178, 1
      %s180 = scalar_select %p177, %s178, %s179
      %p183 = pneg %p177
      %p184 = scmp.eq.s32.totalorder %s22, 1
      %p185 = por %p183, %p184
      %p186 = scmp.ne.s32.totalorder %s178, %s181
      %p187 = scmp.eq.s32.totalorder %s22, 0
      %p188 = por %p186, %p187
      %p189 = scmp.ne.s32.totalorder %s178, %s181
      %p190 = scmp.eq.s32.totalorder %s27, 1
      %p191 = por %p189, %p190
      %p192 = scmp.ne.s32.totalorder %s181, %s182
      %p193 = scmp.eq.s32.totalorder %s27, 0
      %p194 = por %p192, %p193
      %p195 = scmp.ne.s32.totalorder %s181, %s182
      %p196 = scmp.eq.s32.totalorder %s28, 1
      %p197 = por %p195, %p196
      %p199 = scmp.ne.s32.totalorder %s182, %s198
      %p200 = scmp.eq.s32.totalorder %s28, 0
      %p201 = por %p199, %p200
      %p202 = scmp.le.s32.totalorder 1, %s22
      %p203 = scmp.lt.s32.totalorder %s22, 3
      %p204 = pnand %p202, %p203
      %p205 = pneg %p204
      // Predicated region
      $region9: #{tpu_custom_call.1} parent=5 // pred_check
        _
      $region10: #{tpu_custom_call.1} parent=5 // pred_check_branch
        %207 = sbr.rel (%p204) target = $region12
      $region11: #{tpu_custom_call.1} parent=5 // pred_region
        %s208 = ssub.s32 %s22, 1
        // Predicated region
        $region13: #{tpu_custom_call.1} parent=11 // pred_check
          %p209 = pneg %p121
        $region14: #{tpu_custom_call.1} parent=11 // pred_check_branch
          %211 = sbr.rel (%p209) target = $region16
        $region15: #{tpu_custom_call.1} parent=11 // pred_region
          _
        $region16: #{tpu_custom_call.1} parent=11 // pred_fallthru
          _
        // Predicated region
        $region17: #{tpu_custom_call.1} parent=11 // pred_check
          %p212 = pneg %p142
        $region18: #{tpu_custom_call.1} parent=11 // pred_check_branch
          %214 = sbr.rel (%p212) target = $region20
        $region19: #{tpu_custom_call.1} parent=11 // pred_region
          _
        $region20: #{tpu_custom_call.1} parent=11 // pred_fallthru
          _
      $region12: #{tpu_custom_call.1} parent=5 // pred_fallthru
        _
      %p215 = scmp.lt.s32.totalorder %s22, 2
      // Predicated region
      $region21: #{tpu_custom_call.1} parent=5 // pred_check
        %p216 = pneg %p215
      $region22: #{tpu_custom_call.1} parent=5 // pred_check_branch
        %218 = sbr.rel (%p216) target = $region24
      $region23: #{tpu_custom_call.1} parent=5 // pred_region
        // Predicated region
        $region25: #{tpu_custom_call.1} parent=23 // pred_check
          %p219 = pneg %p42
        $region26: #{tpu_custom_call.1} parent=23 // pred_check_branch
          %221 = sbr.rel (%p219) target = $region28
        $region27: #{tpu_custom_call.1} parent=23 // pred_region
          %s222 = sand.u32 %s32, 1
          %s223 = scalar_lea.sflag [#allocation3], %s222
          %s224 = sand.u32 %s32, 1
          %s225 = smul.addr %s224, 8
          %s226 = scalar_lea.vmem [#allocation2], %s225
          %s228 = ssub.s32 128, 128
          %229 = vsyncadd %s223, %s228
          %s230 = smul.addr %s22, 2
          %s231 = smul.addr %s230, 64
          %s232 = scalar_lea.hbm %s0, %s231
          %s233 = sshll.u32 %s226, 4
          %s234 = int_to_ptr.vmem [resolvable:$true] %s233
          %239 = dma.hbm_to_vmem [thread:$0]  %s232, 128, %s234, %s223, 64, 64, 4
        $region28: #{tpu_custom_call.1} parent=23 // pred_fallthru
          _
        // Predicated region
        $region29: #{tpu_custom_call.1} parent=23 // pred_check
          %p240 = pneg %p68
        $region30: #{tpu_custom_call.1} parent=23 // pred_check_branch
          %242 = sbr.rel (%p240) target = $region32
        $region31: #{tpu_custom_call.1} parent=23 // pred_region
          %p243 = scmp.lt.s32.totalorder %s22, 1
          %s244 = scalar_select %p243, %s22, 1
          %s245 = smul.addr %s244, 2
          %s246 = smul.addr %s245, 8
          %s247 = scalar_lea.vmem %s1, %s246
        $region32: #{tpu_custom_call.1} parent=23 // pred_fallthru
          _
        // Predicated region
        $region33: #{tpu_custom_call.1} parent=23 // pred_check
          %p248 = pneg %p94
        $region34: #{tpu_custom_call.1} parent=23 // pred_check_branch
          %250 = sbr.rel (%p248) target = $region36
        $region35: #{tpu_custom_call.1} parent=23 // pred_region
          %p251 = scmp.lt.s32.totalorder %s22, 1
          %s252 = scalar_select %p251, %s22, 1
          %s253 = smul.addr %s252, 2
          %s254 = smul.addr %s253, 8
          %s255 = scalar_lea.vmem %s2, %s254
        $region36: #{tpu_custom_call.1} parent=23 // pred_fallthru
          _
      $region24: #{tpu_custom_call.1} parent=5 // pred_fallthru
        _
      %p256 = scmp.le.s32.totalorder 1, %s22
      %p257 = scmp.lt.s32.totalorder %s22, 3
      %p258 = pnand %p256, %p257
      %p259 = pneg %p258
      // Predicated region
      $region37: #{tpu_custom_call.1} parent=5 // pred_check
        _
      $region38: #{tpu_custom_call.1} parent=5 // pred_check_branch
        %261 = sbr.rel (%p258) target = $region40
      $region39: #{tpu_custom_call.1} parent=5 // pred_region
        %s262 = ssub.s32 %s22, 1
        %s263 = sand.u32 %s35, 1
        %s264 = scalar_lea.sflag [#allocation3], %s263
        %s265 = sand.u32 %s35, 1
        %s266 = smul.addr %s265, 8
        %s267 = scalar_lea.vmem [#allocation2], %s266
        // Predicated region
        $region41: #{tpu_custom_call.1} parent=39 // pred_check
          %p268 = pneg %p48
        $region42: #{tpu_custom_call.1} parent=39 // pred_check_branch
          %270 = sbr.rel (%p268) target = $region44
        $region43: #{tpu_custom_call.1} parent=39 // pred_region
          %271 = dma.done %s264, 128
        $region44: #{tpu_custom_call.1} parent=39 // pred_fallthru
          _
        %s272 = sand.u32 %s35, 1
        %s273 = scalar_lea.sflag [#allocation3], %s272
        %s274 = sand.u32 %s35, 1
        %s275 = smul.addr %s274, 8
        %s276 = scalar_lea.vmem [#allocation2], %s275
        %p277 = pneg %p48
        %p278 = pneg %p45
        %p279 = scmp.lt.s32.totalorder %s27, 1
        %s280 = scalar_select %p279, %s27, 1
        %s281 = smul.addr %s280, 2
        %s282 = smul.addr %s281, 8
        %s283 = scalar_lea.vmem %s1, %s282
        %p284 = pneg %p74
        %p285 = pneg %p71
        %p286 = scmp.lt.s32.totalorder %s27, 1
        %s287 = scalar_select %p286, %s27, 1
        %s288 = smul.addr %s287, 2
        %s289 = smul.addr %s288, 8
        %s290 = scalar_lea.vmem %s2, %s289
        %p291 = pneg %p100
        %p292 = pneg %p97
        %p293 = pneg %p121
        %p294 = pneg %p118
        %p295 = pneg %p142
        %p296 = pneg %p139
        %p297 = pneg %p168
        %p298 = pneg %p165
        %s299 = sand.u32 %s155, 1
        %s300 = scalar_lea.sflag [#allocation4], %s299
        %s301 = sand.u32 %s155, 1
        %s302 = smul.addr %s301, 16
        %s303 = scalar_lea.vmem [#allocation5], %s302
        %p304 = pneg %p194
        %p305 = pneg %p191
        %s306 = sand.u32 %s181, 1
        %s307 = scalar_lea.sflag [#allocation7], %s306
        %s308 = sand.u32 %s181, 1
        %s309 = smul.addr %s308, 2
        %s310 = scalar_lea.vmem [#allocation6], %s309
        %p311 = scmp.lt.s32.totalorder %s27, 1
        %s312 = scalar_select %p311, %s27, 1
        %s313 = smul.addr %s312, 2
        %s314 = smul.addr %s313, 8
        %s315 = scalar_lea.vmem %s1, %s314
        %p316 = scmp.lt.s32.totalorder %s27, 1
        %s317 = scalar_select %p316, %s27, 1
        %s318 = smul.addr %s317, 2
        %s319 = smul.addr %s318, 8
        %s320 = scalar_lea.vmem %s2, %s319
        %v322 = vld [vmem:[%s267] sm:$0xf]
        %v323 = vld [vmem:[%s267 + $0x4] sm:$0xf]
        %v324 = vld [vmem:[%s315] sm:$0xff]
        %v325 = vld [vmem:[%s315 + $0x8] sm:$0xff]
        %v326 = vld [vmem:[%s320] sm:$0xff]
        %v327 = vld [vmem:[%s320 + $0x8] sm:$0xff]
        %v328 = vpack.c.bf16 %v325, %v324
        %v329 = vld [vmem:[%s3] sm:$0xf]
        %v330 = vld [vmem:[%s3 + $0x4] sm:$0xf]
        %v333 = vunpack.c.l.b16 %v329
        %v334 = vunpack.c.l.b16 %v330
        %v335 = vpack.c.b16 %v334, %v333
        %vm337 = vcmask 130048
        %v339 = vsel %vm337, %v328, 0
        %341 = vmatprep.subr.bf16.mxu0 0
        %342 = vmatpush1.bf16.msra.mxu0 %v335
        %343 = vmatprep.subr.bf16.mxu0 0
        %344 = vmatpush1.bf16.msra.mxu0 0
        %345 = vmatprep.subr.bf16.mxu0 0
        %346 = vmatpush1.bf16.msra.mxu0 0
        %347 = vmatprep.subr.bf16.mxu0 0
        %348 = vmatpush1.bf16.msra.mxu0 0
        %349 = vmatprep.subr.bf16.mxu0 0
        %350 = vmatpush1.bf16.msra.mxu0 0
        %351 = vmatprep.subr.bf16.mxu0 0
        %352 = vmatpush1.bf16.msra.mxu0 0
        %353 = vmatprep.subr.bf16.mxu0 0
        %354 = vmatpush1.bf16.msra.mxu0 0
        %355 = vmatprep.subr.bf16.mxu0 0
        %356 = vmatpush1.bf16.msra.mxu0 0
        %357 = vmatprep.subr.bf16.mxu0 0
        %358 = vmatpush1.bf16.msra.mxu0 0
        %359 = vmatprep.subr.bf16.mxu0 0
        %360 = vmatpush1.bf16.msra.mxu0 0
        %361 = vmatprep.subr.bf16.mxu0 0
        %362 = vmatpush1.bf16.msra.mxu0 0
        %363 = vmatprep.subr.bf16.mxu0 0
        %364 = vmatpush1.bf16.msra.mxu0 0
        %365 = vmatprep.subr.bf16.mxu0 0
        %366 = vmatpush1.bf16.msra.mxu0 0
        %367 = vmatprep.subr.bf16.mxu0 0
        %368 = vmatpush1.bf16.msra.mxu0 0
        %369 = vmatprep.subr.bf16.mxu0 0
        %370 = vmatpush1.bf16.msra.mxu0 0
        %371 = vmatprep.subr.bf16.mxu0 0
        %372 = vmatpush1.bf16.msra.mxu0 0
        %373 = vmatprep.mubr.bf16.mxu0 0
        %374 = vmatmul.mubr.bf16.gmra.mrb[0].mxu0 %v339
        %v375 = vpop.f32.mrb[0].mxu0
        %v376 = vadd.f32 0.0, %v375
        %v377 = vpop.f32.mrb[0].mxu0
        %v378 = vpop.f32.mrb[0].mxu0
        %v379 = vadd.f32 0.0, %v378
        %v380 = vpop.f32.mrb[0].mxu0
        %381 = vdwg.mxu0
        %v382 = vpack.c.bf16 %v379, %v376
        %v383 = vld [vmem:[%s4] sm:$0x1]
        %v385 = vlaneseq
        %v386 = vshrl.u32 %v385, 7
        %v387 = vsub.s32 0, %v386
        %v388 = vrot.slane %v383, %v387
        %v392 = vunpack.c.l.b16 %v322
        %v393 = vunpack.c.l.b16 %v323
        %v394 = vpack.c.b16 %v393, %v392
        %v396 = vsel %vm337, %v394, 0
        %398 = vmatprep.subr.bf16.mxu0 0
        %399 = vmatpush1.bf16.msra.mxu0 %v382
        %400 = vmatprep.subr.bf16.mxu0 0
        %401 = vmatpush1.bf16.msra.mxu0 0
        %402 = vmatprep.subr.bf16.mxu0 0
        %403 = vmatpush1.bf16.msra.mxu0 0
        %404 = vmatprep.subr.bf16.mxu0 0
        %405 = vmatpush1.bf16.msra.mxu0 0
        %406 = vmatprep.subr.bf16.mxu0 0
        %407 = vmatpush1.bf16.msra.mxu0 0
        %408 = vmatprep.subr.bf16.mxu0 0
        %409 = vmatpush1.bf16.msra.mxu0 0
        %410 = vmatprep.subr.bf16.mxu0 0
        %411 = vmatpush1.bf16.msra.mxu0 0
        %412 = vmatprep.subr.bf16.mxu0 0
        %413 = vmatpush1.bf16.msra.mxu0 0
        %414 = vmatprep.subr.bf16.mxu0 0
        %415 = vmatpush1.bf16.msra.mxu0 0
        %416 = vmatprep.subr.bf16.mxu0 0
        %417 = vmatpush1.bf16.msra.mxu0 0
        %418 = vmatprep.subr.bf16.mxu0 0
        %419 = vmatpush1.bf16.msra.mxu0 0
        %420 = vmatprep.subr.bf16.mxu0 0
        %421 = vmatpush1.bf16.msra.mxu0 0
        %422 = vmatprep.subr.bf16.mxu0 0
        %423 = vmatpush1.bf16.msra.mxu0 0
        %424 = vmatprep.subr.bf16.mxu0 0
        %425 = vmatpush1.bf16.msra.mxu0 0
        %426 = vmatprep.subr.bf16.mxu0 0
        %427 = vmatpush1.bf16.msra.mxu0 0
        %428 = vmatprep.subr.bf16.mxu0 0
        %429 = vmatpush1.bf16.msra.mxu0 0
        %430 = vmatprep.mubr.bf16.mxu0 0
        %431 = vmatmul.mubr.bf16.gmra.mrb[0].mxu0 %v396
        %v432 = vpop.f32.mrb[0].mxu0
        %v433 = vadd.f32 %v388, %v432
        %v434 = vpop.f32.mrb[0].mxu0
        %v435 = vpop.f32.mrb[0].mxu0
        %v436 = vadd.f32 %v388, %v435
        %v437 = vpop.f32.mrb[0].mxu0
        %438 = vdwg.mxu0
        %440 = vset.pattern.permute.xlu0 0
        %441 = vperm.xlu0 %440, %v326
        %v442 = vpop.permute.xlu0 %441
        %445 = vset.pattern.permute.xlu0 0
        %446 = vperm.xlu0 %445, %v327
        %v447 = vpop.permute.xlu0 %446
        %v449 = vmul.f32 %v433, %v442
        %v450 = vmul.f32 %v436, %v447
        %451 = vst.msk [vmem:[%s303] sm:$0xff] %vm337, %v433
        %452 = vst.msk [vmem:[%s303 + $0x8] sm:$0xff] %vm337, %v436
        %v453 = vsel %vm337, %v449, 0.0
        %v454 = vsel %vm337, %v450, 0.0
        %v455 = vadd.f32 %v453, %v454
        %v456 = vrot.slane %v455, 4
        %v457 = vadd.f32 %v455, %v456
        %v458 = vrot.slane %v457, 2
        %v459 = vadd.f32 %v457, %v458
        %v460 = vrot.slane %v459, 1
        %v461 = vadd.f32 %v459, %v460
        %v462 = vmul.f32 %v449, %v433
        %v463 = vmul.f32 %v450, %v436
        %v464 = vsel %vm337, %v462, 0.0
        %v465 = vsel %vm337, %v463, 0.0
        %v466 = vadd.f32 %v464, %v465
        %v467 = vrot.slane %v466, 4
        %v468 = vadd.f32 %v466, %v467
        %v469 = vrot.slane %v468, 2
        %v470 = vadd.f32 %v468, %v469
        %v471 = vrot.slane %v470, 1
        %v472 = vadd.f32 %v470, %v471
        %vm473 = vcmask 1040384
        %v474 = vsel %vm473, %v461, %v472
        %vm475 = vcmask 123904
        %476 = vst.msk [vmem:[%s310] sm:$0x3] %vm475, %v474
        %s477 = sand.u32 %s155, 1
        %s478 = scalar_lea.sflag [#allocation4], %s477
        %s479 = sand.u32 %s155, 1
        %s480 = smul.addr %s479, 16
        %s481 = scalar_lea.vmem [#allocation5], %s480
        %s482 = sand.u32 %s181, 1
        %s483 = scalar_lea.sflag [#allocation7], %s482
        %s484 = sand.u32 %s181, 1
        %s485 = smul.addr %s484, 2
        %s486 = scalar_lea.vmem [#allocation6], %s485
        // Predicated region
        $region45: #{tpu_custom_call.1} parent=39 // pred_check
          %p487 = pneg %p165
        $region46: #{tpu_custom_call.1} parent=39 // pred_check_branch
          %489 = sbr.rel (%p487) target = $region48
        $region47: #{tpu_custom_call.1} parent=39 // pred_region
          %s491 = ssub.s32 256, 256
          %492 = vsyncadd %s478, %s491
          %s493 = smul.addr %s27, 2
          %s494 = smul.addr %s493, 128
          %s495 = scalar_lea.hbm %s5, %s494
          %s496 = sshll.u32 %s481, 4
          %s497 = int_to_ptr.vmem [resolvable:$true] %s496
          %502 = dma.vmem_to_hbm [thread:$0]  %s497, 256, %s495, %s478, 128, 128, 8
        $region48: #{tpu_custom_call.1} parent=39 // pred_fallthru
          _
        // Predicated region
        $region49: #{tpu_custom_call.1} parent=39 // pred_check
          %p503 = pneg %p191
        $region50: #{tpu_custom_call.1} parent=39 // pred_check_branch
          %505 = sbr.rel (%p503) target = $region52
        $region51: #{tpu_custom_call.1} parent=39 // pred_region
          %s507 = ssub.s32 32, 32
          %508 = vsyncadd %s483, %s507
          %s509 = smul.addr %s27, 32
          %s510 = scalar_lea.hbm %s6, %s509
          %s512 = sshll.u32 %s486, 4
          %s513 = int_to_ptr.vmem [resolvable:$true] %s512
          %515 = dma.vmem_to_hbm [thread:$0]  %s513, 32, %s510, %s483
        $region52: #{tpu_custom_call.1} parent=39 // pred_fallthru
          _
      $region40: #{tpu_custom_call.1} parent=5 // pred_fallthru
        _
      %p516 = scmp.le.s32.totalorder 2, %s22
      // Predicated region
      $region53: #{tpu_custom_call.1} parent=5 // pred_check
        %p517 = pneg %p516
      $region54: #{tpu_custom_call.1} parent=5 // pred_check_branch
        %519 = sbr.rel (%p517) target = $region56
      $region55: #{tpu_custom_call.1} parent=5 // pred_region
        %s520 = ssub.s32 %s22, 2
        // Predicated region
        $region57: #{tpu_custom_call.1} parent=55 // pred_check
          %p521 = pneg %p171
        $region58: #{tpu_custom_call.1} parent=55 // pred_check_branch
          %523 = sbr.rel (%p521) target = $region60
        $region59: #{tpu_custom_call.1} parent=55 // pred_region
          %s524 = sand.u32 %s156, 1
          %s525 = scalar_lea.sflag [#allocation4], %s524
          %s526 = sand.u32 %s156, 1
          %s527 = smul.addr %s526, 16
          %s528 = scalar_lea.vmem [#allocation5], %s527
          %529 = dma.done %s525, 256
        $region60: #{tpu_custom_call.1} parent=55 // pred_fallthru
          _
        // Predicated region
        $region61: #{tpu_custom_call.1} parent=55 // pred_check
          %p530 = pneg %p197
        $region62: #{tpu_custom_call.1} parent=55 // pred_check_branch
          %532 = sbr.rel (%p530) target = $region64
        $region63: #{tpu_custom_call.1} parent=55 // pred_region
          %s533 = sand.u32 %s182, 1
          %s534 = scalar_lea.sflag [#allocation7], %s533
          %s535 = sand.u32 %s182, 1
          %s536 = smul.addr %s535, 2
          %s537 = scalar_lea.vmem [#allocation6], %s536
          %538 = dma.done %s534, 32
        $region64: #{tpu_custom_call.1} parent=55 // pred_fallthru
          _
      $region56: #{tpu_custom_call.1} parent=5 // pred_fallthru
        _
    $region6: #{tpu_custom_call.1} parent=1 // loop_footer
      %s26 = sadd.s32 1, %s22
    $region7: #{tpu_custom_call.1} parent=1 // loop_footer_branch
      %21 = sbr.rel target = $region3
    $region8: #{tpu_custom_call.1} parent=1 // loop_exit
      _
    %539 = vsyncpa [#allocation3], 1
    %s540 = scalar_lea.sflag [#allocation3], 1
    %541 = vsyncpa %s540, 1
    %542 = vsyncpa [#allocation4], 1
    %s543 = scalar_lea.sflag [#allocation4], 1
    %544 = vsyncpa %s543, 1
    %545 = vsyncpa [#allocation7], 1
    %s546 = scalar_lea.sflag [#allocation7], 1
    %547 = vsyncpa %s546, 1

</llo_original>
